<compile_context>
chip_gen: v7x
topology: tpu7x:2x2x1
jax: 0.10.0
libtpu: 0.0.40
codegen_flags: <defaults>
</compile_context>

<pallas_src>
import jax
import jax.numpy as jnp
from jax import lax
from jax.experimental import pallas as pl
from jax.experimental.pallas import tpu as pltpu

KH = KW = 4            # kernel_size=4 for both up (deconv) and down (conv) blocks
_TM_CAP = 512          # M-tile (lanes); >=512 amortizes per-step overhead, fits v7x VMEM


def _pick_tile(m, cap=_TM_CAP):
    for t in (1024, 512, 256, 128):
        if t <= cap and t <= m and m % t == 0:
            return t
    return m  # tiny / odd sizes: single block (block == full dim is always legal)


# ---------------------------------------------------------------------------
# Pallas kernels: transposed fused GEMM   out(Cout, TM) = W(Cout, K) @ P(K, TM)
# with bias + PReLU (+ optional residual) epilogue in f32.
# ---------------------------------------------------------------------------
def _gemm_bias_prelu_kernel(p_ref, w_ref, b_ref, a_ref, o_ref):
    acc = jnp.dot(w_ref[...], p_ref[...], preferred_element_type=jnp.float32)
    acc = acc + b_ref[...]                     # (Cout, 1) broadcast over lanes
    alpha = a_ref[0]                           # PReLU slope (scalar, SMEM)
    o_ref[...] = jnp.where(acc >= 0.0, acc, alpha * acc).astype(o_ref.dtype)


def _gemm_bias_prelu_res_kernel(p_ref, w_ref, b_ref, a_ref, r_ref, o_ref):
    acc = jnp.dot(w_ref[...], p_ref[...], preferred_element_type=jnp.float32)
    acc = acc + b_ref[...]
    alpha = a_ref[0]
    acc = jnp.where(acc >= 0.0, acc, alpha * acc)
    o_ref[...] = (acc + r_ref[...]).astype(o_ref.dtype)


def _fused_gemm(patches_t, wmat, bias, alpha, residual_t=None, tm_cap=_TM_CAP):
    """patches_t: (K, M) bf16, wmat: (Cout, K) bf16, bias: (Cout,) f32,
    alpha: (1,) f32, residual_t: optional (Cout, M) f32  ->  (Cout, M) f32."""
    K, M = patches_t.shape
    Cout = wmat.shape[0]
    TM = _pick_tile(M, tm_cap)
    grid = (M // TM,)

    in_specs = [
        pl.BlockSpec((K, TM), lambda i: (0, i)),                    # patches (streamed)
        pl.BlockSpec((Cout, K), lambda i: (0, 0)),                  # weights (resident)
        pl.BlockSpec((Cout, 1), lambda i: (0, 0)),                  # bias
        pl.BlockSpec(memory_space=pltpu.MemorySpace.SMEM),          # PReLU slope
    ]
    args = [patches_t, wmat, bias.reshape(Cout, 1), alpha]
    if residual_t is None:
        kernel = _gemm_bias_prelu_kernel
    else:
        kernel = _gemm_bias_prelu_res_kernel
        in_specs.append(pl.BlockSpec((Cout, TM), lambda i: (0, i)))  # residual (streamed)
        args.append(residual_t)

    bytes_accessed = (patches_t.size * patches_t.dtype.itemsize
                      + wmat.size * wmat.dtype.itemsize
                      + Cout * 4 + 4
                      + M * Cout * 4 * (2 if residual_t is not None else 1))
    cost = pl.CostEstimate(flops=2 * M * K * Cout, transcendentals=0,
                           bytes_accessed=bytes_accessed)

    return pl.pallas_call(
        kernel,
        out_shape=jax.ShapeDtypeStruct((Cout, M), jnp.float32),
        grid=grid,
        in_specs=in_specs,
        out_specs=pl.BlockSpec((Cout, TM), lambda i: (0, i)),
        compiler_params=pltpu.CompilerParams(dimension_semantics=("parallel",)),
        cost_estimate=cost,
    )(*args)


# ---------------------------------------------------------------------------
# ConvBlock equivalent: Conv2d(k=4, s=2, p=1) + bias + PReLU (+ fused residual)
# ---------------------------------------------------------------------------
def conv_block_down(x, w, bias, alpha, residual):
    """x: (Cin, N, H, W) f32 channel-major. w: (Cout, Cin, 4, 4) (torch Conv2d).
    residual: (Cout, N, H//2, W//2) f32. Returns (Cout, N, H//2, W//2) f32."""
    C, N, H, W = x.shape
    Cout = w.shape[0]
    OH, OW = H // 2, W // 2
    xp = jnp.pad(x, ((0, 0), (0, 0), (1, 1), (1, 1)))
    cols = [xp[:, :, a:a + 2 * OH:2, b:b + 2 * OW:2]
            for a in range(4) for b in range(4)]                     # 16 x (C,N,OH,OW)
    patches = (jnp.stack(cols, axis=1)                               # (C,16,N,OH,OW)
               .reshape(C * 16, N * OH * OW).astype(jnp.bfloat16))   # K = (ci, a, b)
    wmat = w.reshape(Cout, C * 16).astype(jnp.bfloat16)              # same K ordering
    res2d = residual.reshape(Cout, N * OH * OW)
    out2d = _fused_gemm(patches, wmat, bias, alpha, residual_t=res2d)
    return out2d.reshape(Cout, N, OH, OW)


# ---------------------------------------------------------------------------
# DeconvBlock equivalent: ConvTranspose2d(k=4, s=2, p=1) + bias + PReLU
# computed as ONE 9-tap GEMM producing all 4 output parities.
# ---------------------------------------------------------------------------
_UP_TAPS = {0: ((-1, 3), (0, 1)),   # output parity 0 uses input offsets -1 (k=3), 0 (k=1)
            1: ((0, 2), (1, 0))}    # output parity 1 uses input offsets  0 (k=2), 1 (k=0)


def _deconv_wmat(w_t):
    """(Cin, Cout, 4, 4) ConvTranspose2d weight -> (4*Cout, 9*Cin) matrix that maps a
    3x3 input neighbourhood (K ordered (ci, ty, tx)) to the 4 output parities (py,px,co)."""
    Cin, Cout = w_t.shape[0], w_t.shape[1]
    wmat = jnp.zeros((4 * Cout, 9 * Cin), jnp.float32)
    for py in range(2):
        for px in range(2):
            row0 = (py * 2 + px) * Cout
            for ty, ky in _UP_TAPS[py]:
                for tx, kx in _UP_TAPS[px]:
                    col = 3 * (ty + 1) + (tx + 1)
                    wmat = wmat.at[row0:row0 + Cout, col::9].set(w_t[:, :, ky, kx].T)
    return wmat


def deconv_block_up(x, w_t, bias, alpha):
    """x: (Cin, N, H, W) f32. w_t: (Cin, Cout, 4, 4) (torch ConvTranspose2d).
    Returns (Cout, N, 2H, 2W) f32."""
    C, N, H, W = x.shape
    Cout = w_t.shape[1]
    xp = jnp.pad(x, ((0, 0), (0, 0), (1, 1), (1, 1)))
    cols = [xp[:, :, a:a + H, b:b + W] for a in range(3) for b in range(3)]
    patches = (jnp.stack(cols, axis=1)                               # (C,9,N,H,W)
               .reshape(C * 9, N * H * W).astype(jnp.bfloat16))
    wmat = _deconv_wmat(w_t).astype(jnp.bfloat16)                    # (4*Cout, 9*C)
    bias4 = jnp.tile(bias, 4)                                        # rows = (py,px,co)
    out2d = _fused_gemm(patches, wmat, bias4, alpha)                 # (4*Cout, N*H*W)
    out = out2d.reshape(2, 2, Cout, N, H, W)                         # (py,px,co,n,my,mx)
    out = out.transpose(2, 3, 4, 0, 5, 1).reshape(Cout, N, 2 * H, 2 * W)
    return out


# ---------------------------------------------------------------------------
# Encoder_MDCBlock1 forward (mode='iter1' / 'conv')
# ---------------------------------------------------------------------------
def encoder_mdcblock1_forward(params, ft_l, ft_h_list):
    """ft_l, ft_h_list are NCHW (PyTorch layout); output is NCHW."""
    # TODO(synk): modes 'iter2'/'iter3'/'iter4' are alternate loop orders over the same
    # conv/deconv kernels; only the default 'iter1' path is wired up here.
    num_ft = len(params["up"])
    n = len(ft_h_list)
    x = jnp.transpose(ft_l, (1, 0, 2, 3))              # -> channel-major (C, N, H, W)
    hs = [jnp.transpose(h, (1, 0, 2, 3)) for h in ft_h_list]
    ft_l_list = []
    for i in range(n):
        ft_l_list.append(x)
        w, b, a = params["up"][num_ft - n + i]
        x = deconv_block_up(x, w, b, a)
    ft_fusion = x
    for i in range(n):
        w, b, a = params["down"][num_ft - i - 1]
        diff = ft_fusion - hs[i]                        # fused by XLA into the im2col producer
        ft_fusion = conv_block_down(diff, w, b, a, residual=ft_l_list[n - i - 1])
    return jnp.transpose(ft_fusion, (1, 0, 2, 3))       # back to NCHW


# ---------------------------------------------------------------------------
# Deterministic parameter init (shapes follow the module __init__)
# ---------------------------------------------------------------------------
def init_params(key, num_filter, num_ft_arg):
    num_ft = num_ft_arg - 1
    up, down = [], []
    keys = jax.random.split(key, 2 * num_ft)
    for i in range(num_ft):
        cin = num_filter // (2 ** i)
        cout = num_filter // (2 ** (i + 1))
        kw_, kb_ = jax.random.split(keys[i])
        w = 0.1 * jax.random.normal(kw_, (cin, cout, KH, KW), jnp.float32)  # deconv (in,out,kh,kw)
        b = 0.05 * jax.random.normal(kb_, (cout,), jnp.float32)
        up.append((w, b, jnp.full((1,), 0.25, jnp.float32)))                # PReLU default slope
    for i in range(num_ft):
        cin = num_filter // (2 ** (i + 1))
        cout = num_filter // (2 ** i)
        kw_, kb_ = jax.random.split(keys[num_ft + i])
        w = 0.1 * jax.random.normal(kw_, (cout, cin, KH, KW), jnp.float32)  # conv (out,in,kh,kw)
        b = 0.05 * jax.random.normal(kb_, (cout,), jnp.float32)
        down.append((w, b, jnp.full((1,), 0.25, jnp.float32)))
    return {"up": up, "down": down}


# ---------------------------------------------------------------------------
# Pure-JAX (lax.conv) references: `quant=True` mirrors the kernel's bf16 MXU
# operands (tight check), `quant=False` is the original f32 module (sanity check).
# ---------------------------------------------------------------------------
def _prelu(x, a):
    return jnp.where(x >= 0, x, a * x)


def _q(x):
    return x.astype(jnp.bfloat16).astype(jnp.float32)


def _ref_conv(x, w, b, a, quant):
    qx, qw = (_q(x), _q(w)) if quant else (x, w)
    y = lax.conv_general_dilated(qx, qw, (2, 2), ((1, 1), (1, 1)),
                                 dimension_numbers=("NCHW", "OIHW", "NCHW"))
    return _prelu(y + b.reshape(1, -1, 1, 1), a[0])


def _ref_deconv(x, w, b, a, quant):
    w_eq = jnp.flip(w, axis=(2, 3)).transpose(1, 0, 2, 3)
    qx, qw = (_q(x), _q(w_eq)) if quant else (x, w_eq)
    y = lax.conv_general_dilated(qx, qw, (1, 1), ((2, 2), (2, 2)),
                                 lhs_dilation=(2, 2),
                                 dimension_numbers=("NCHW", "OIHW", "NCHW"))
    return _prelu(y + b.reshape(1, -1, 1, 1), a[0])


def ref_forward(params, ft_l, ft_h_list, quant=True):
    num_ft = len(params["up"])
    n = len(ft_h_list)
    ft_l_list = []
    for i in range(n):
        ft_l_list.append(ft_l)
        w, b, a = params["up"][num_ft - n + i]
        ft_l = _ref_deconv(ft_l, w, b, a, quant)
    ft_fusion = ft_l
    for i in range(n):
        w, b, a = params["down"][num_ft - i - 1]
        ft_fusion = _ref_conv(ft_fusion - ft_h_list[i], w, b, a, quant) + ft_l_list[n - i - 1]
    return ft_fusion


# ---------------------------------------------------------------------------
if __name__ == "__main__":
    key = jax.random.PRNGKey(0)
    num_filter, num_ft_arg = 8, 3            # Encoder_MDCBlock1(8, 3) -> num_ft = 2
    k1, k2, k3, k4 = jax.random.split(key, 4)
    params = init_params(k1, num_filter, num_ft_arg)

    B, H, W = 2, 8, 8
    ft_l = jax.random.normal(k2, (B, num_filter, H, W), jnp.float32)
    ft_h_list = [
        jax.random.normal(k3, (B, num_filter // 4, 4 * H, 4 * W), jnp.float32),
        jax.random.normal(k4, (B, num_filter // 2, 2 * H, 2 * W), jnp.float32),
    ]

    fwd = jax.jit(encoder_mdcblock1_forward)
    out = jax.block_until_ready(fwd(params, ft_l, ft_h_list))
    assert out.shape == ft_l.shape, (out.shape, ft_l.shape)

    # Tight check vs a reference with identical bf16 operand quantization.
    ref_q = ref_forward(params, ft_l, ft_h_list, quant=True)
    err_q = float(jnp.max(jnp.abs(out - ref_q)))
    assert err_q < 1e-3, f"max abs error vs bf16-mirrored reference too large: {err_q}"

    # Loose sanity check vs the pure-f32 module semantics.
    ref_f = ref_forward(params, ft_l, ft_h_list, quant=False)
    err_f = float(jnp.max(jnp.abs(out - ref_f)))
    assert err_f < 1e-1, f"max abs error vs f32 reference too large: {err_f}"

    print("KERNEL_OK")
</pallas_src>

<mosaic_0001>
module attributes {stable_mosaic.version = 11 : i64} {
  func.func @_gemm_bias_prelu_kernel(%arg0: i32, %arg1: memref<72x128xbf16, #tpu.memory_space<vmem>>, %arg2: memref<16x72xbf16, #tpu.memory_space<vmem>>, %arg3: memref<16x1xf32, #tpu.memory_space<vmem>>, %arg4: memref<1xf32, #tpu.memory_space<smem>>, %arg5: memref<16x128xf32, #tpu.memory_space<vmem>>) attributes {dimension_semantics = [#tpu.dimension_semantics<parallel>], iteration_bounds = array<i64: 1>, scalar_prefetch = 0 : i64, scratch_operands = 0 : i64, tpu.core_type = #tpu.core_type<tc>, window_params = [{transform_indices = @transform_0, window_bounds = array<i64: 72, 128>}, {pipeline_mode = #tpu.pipeline_mode<synchronous>, transform_indices = @transform_1, window_bounds = array<i64: 16, 72>}, {pipeline_mode = #tpu.pipeline_mode<synchronous>, transform_indices = @transform_2, window_bounds = array<i64: 16, 1>}, {transform_indices = @transform_3, window_bounds = array<i64: 1>}, {transform_indices = @transform_4, window_bounds = array<i64: 16, 128>}]} {
    %c0 = arith.constant 0 : index
    %c0_0 = arith.constant 0 : index
    %0 = vector.load %arg2[%c0, %c0_0] : memref<16x72xbf16, #tpu.memory_space<vmem>>, vector<16x72xbf16>
    %c0_1 = arith.constant 0 : index
    %c0_2 = arith.constant 0 : index
    %1 = vector.load %arg1[%c0_1, %c0_2] : memref<72x128xbf16, #tpu.memory_space<vmem>>, vector<72x128xbf16>
    %cst = arith.constant dense<0.000000e+00> : vector<16x128xf32>
    %2 = tpu.matmul %0, %1, %cst {dimension_numbers = #tpu.dot_dimension_numbers<[1], [0], [0], [1], [0, 0, 1, 1], [], []>} : vector<16x72xbf16>, vector<72x128xbf16>, vector<16x128xf32> -> vector<16x128xf32>
    %c0_3 = arith.constant 0 : index
    %c0_4 = arith.constant 0 : index
    %3 = vector.load %arg3[%c0_3, %c0_4] : memref<16x1xf32, #tpu.memory_space<vmem>>, vector<16x1xf32>
    %4 = vector.broadcast %3 : vector<16x1xf32> to vector<16x128xf32>
    %5 = arith.addf %2, %4 : vector<16x128xf32>
    %c0_5 = arith.constant 0 : index
    %6 = memref.load %arg4[%c0_5] : memref<1xf32, #tpu.memory_space<smem>>
    %cst_6 = arith.constant 0.000000e+00 : f32
    %7 = vector.broadcast %cst_6 : f32 to vector<16x128xf32>
    %8 = arith.cmpf oge, %5, %7 : vector<16x128xf32>
    %9 = vector.broadcast %6 : f32 to vector<16x128xf32>
    %10 = arith.mulf %9, %5 : vector<16x128xf32>
    %11 = arith.select %8, %5, %10 : vector<16x128xi1>, vector<16x128xf32>
    %c0_7 = arith.constant 0 : index
    %c0_8 = arith.constant 0 : index
    %12 = vector.load %arg5[%c0_7, %c0_8] : memref<16x128xf32, #tpu.memory_space<vmem>>, vector<16x128xf32>
    tpu.vector_store %arg5[%c0_7, %c0_8], %11 {strides = array<i32>} : memref<16x128xf32, #tpu.memory_space<vmem>>, vector<16x128xf32>,
    return
  }
  func.func @transform_0(%arg0: i32) -> (i32, i32) {
    %c0_i32 = arith.constant 0 : i32
    %c0_i32_0 = arith.constant 0 : i32
    return %c0_i32, %arg0 : i32, i32
  }
  func.func @transform_1(%arg0: i32) -> (i32, i32) {
    %c0_i32 = arith.constant 0 : i32
    %c0_i32_0 = arith.constant 0 : i32
    %c0_i32_1 = arith.constant 0 : i32
    return %c0_i32, %c0_i32_0 : i32, i32
  }
  func.func @transform_2(%arg0: i32) -> (i32, i32) {
    %c0_i32 = arith.constant 0 : i32
    %c0_i32_0 = arith.constant 0 : i32
    %c0_i32_1 = arith.constant 0 : i32
    return %c0_i32, %c0_i32_0 : i32, i32
  }
  func.func @transform_3(%arg0: i32) -> i32 {
    %c0_i32 = arith.constant 0 : i32
    %c0_i32_0 = arith.constant 0 : i32
    return %c0_i32 : i32
  }
  func.func @transform_4(%arg0: i32) -> (i32, i32) {
    %c0_i32 = arith.constant 0 : i32
    %c0_i32_0 = arith.constant 0 : i32
    return %c0_i32, %arg0 : i32, i32
  }
}

module attributes {stable_mosaic.version = 11 : i64} {
  func.func @_gemm_bias_prelu_kernel(%arg0: i32, %arg1: memref<36x512xbf16, #tpu.memory_space<vmem>>, %arg2: memref<8x36xbf16, #tpu.memory_space<vmem>>, %arg3: memref<8x1xf32, #tpu.memory_space<vmem>>, %arg4: memref<1xf32, #tpu.memory_space<smem>>, %arg5: memref<8x512xf32, #tpu.memory_space<vmem>>) attributes {dimension_semantics = [#tpu.dimension_semantics<parallel>], iteration_bounds = array<i64: 1>, scalar_prefetch = 0 : i64, scratch_operands = 0 : i64, tpu.core_type = #tpu.core_type<tc>, window_params = [{transform_indices = @transform_0, window_bounds = array<i64: 36, 512>}, {pipeline_mode = #tpu.pipeline_mode<synchronous>, transform_indices = @transform_1, window_bounds = array<i64: 8, 36>}, {pipeline_mode = #tpu.pipeline_mode<synchronous>, transform_indices = @transform_2, window_bounds = array<i64: 8, 1>}, {transform_indices = @transform_3, window_bounds = array<i64: 1>}, {transform_indices = @transform_4, window_bounds = array<i64: 8, 512>}]} {
    %c0 = arith.constant 0 : index
    %c0_0 = arith.constant 0 : index
    %0 = vector.load %arg2[%c0, %c0_0] : memref<8x36xbf16, #tpu.memory_space<vmem>>, vector<8x36xbf16>
    %c0_1 = arith.constant 0 : index
    %c0_2 = arith.constant 0 : index
    %1 = vector.load %arg1[%c0_1, %c0_2] : memref<36x512xbf16, #tpu.memory_space<vmem>>, vector<36x512xbf16>
    %cst = arith.constant dense<0.000000e+00> : vector<8x512xf32>
    %2 = tpu.matmul %0, %1, %cst {dimension_numbers = #tpu.dot_dimension_numbers<[1], [0], [0], [1], [0, 0, 1, 1], [], []>} : vector<8x36xbf16>, vector<36x512xbf16>, vector<8x512xf32> -> vector<8x512xf32>
    %c0_3 = arith.constant 0 : index
    %c0_4 = arith.constant 0 : index
    %3 = vector.load %arg3[%c0_3, %c0_4] : memref<8x1xf32, #tpu.memory_space<vmem>>, vector<8x1xf32>
    %4 = vector.broadcast %3 : vector<8x1xf32> to vector<8x512xf32>
    %5 = arith.addf %2, %4 : vector<8x512xf32>
    %c0_5 = arith.constant 0 : index
    %6 = memref.load %arg4[%c0_5] : memref<1xf32, #tpu.memory_space<smem>>
    %cst_6 = arith.constant 0.000000e+00 : f32
    %7 = vector.broadcast %cst_6 : f32 to vector<8x512xf32>
    %8 = arith.cmpf oge, %5, %7 : vector<8x512xf32>
    %9 = vector.broadcast %6 : f32 to vector<8x512xf32>
    %10 = arith.mulf %9, %5 : vector<8x512xf32>
    %11 = arith.select %8, %5, %10 : vector<8x512xi1>, vector<8x512xf32>
    %c0_7 = arith.constant 0 : index
    %c0_8 = arith.constant 0 : index
    %12 = vector.load %arg5[%c0_7, %c0_8] : memref<8x512xf32, #tpu.memory_space<vmem>>, vector<8x512xf32>
    tpu.vector_store %arg5[%c0_7, %c0_8], %11 {strides = array<i32>} : memref<8x512xf32, #tpu.memory_space<vmem>>, vector<8x512xf32>,
    return
  }
  func.func @transform_0(%arg0: i32) -> (i32, i32) {
    %c0_i32 = arith.constant 0 : i32
    %c0_i32_0 = arith.constant 0 : i32
    return %c0_i32, %arg0 : i32, i32
  }
  func.func @transform_1(%arg0: i32) -> (i32, i32) {
    %c0_i32 = arith.constant 0 : i32
    %c0_i32_0 = arith.constant 0 : i32
    %c0_i32_1 = arith.constant 0 : i32
    return %c0_i32, %c0_i32_0 : i32, i32
  }
  func.func @transform_2(%arg0: i32) -> (i32, i32) {
    %c0_i32 = arith.constant 0 : i32
    %c0_i32_0 = arith.constant 0 : i32
    %c0_i32_1 = arith.constant 0 : i32
    return %c0_i32, %c0_i32_0 : i32, i32
  }
  func.func @transform_3(%arg0: i32) -> i32 {
    %c0_i32 = arith.constant 0 : i32
    %c0_i32_0 = arith.constant 0 : i32
    return %c0_i32 : i32
  }
  func.func @transform_4(%arg0: i32) -> (i32, i32) {
    %c0_i32 = arith.constant 0 : i32
    %c0_i32_0 = arith.constant 0 : i32
    return %c0_i32, %arg0 : i32, i32
  }
}

module attributes {stable_mosaic.version = 11 : i64} {
  func.func @_gemm_bias_prelu_res_kernel(%arg0: i32, %arg1: memref<32x512xbf16, #tpu.memory_space<vmem>>, %arg2: memref<4x32xbf16, #tpu.memory_space<vmem>>, %arg3: memref<4x1xf32, #tpu.memory_space<vmem>>, %arg4: memref<1xf32, #tpu.memory_space<smem>>, %arg5: memref<4x512xf32, #tpu.memory_space<vmem>>, %arg6: memref<4x512xf32, #tpu.memory_space<vmem>>) attributes {dimension_semantics = [#tpu.dimension_semantics<parallel>], iteration_bounds = array<i64: 1>, scalar_prefetch = 0 : i64, scratch_operands = 0 : i64, tpu.core_type = #tpu.core_type<tc>, window_params = [{transform_indices = @transform_0, window_bounds = array<i64: 32, 512>}, {pipeline_mode = #tpu.pipeline_mode<synchronous>, transform_indices = @transform_1, window_bounds = array<i64: 4, 32>}, {pipeline_mode = #tpu.pipeline_mode<synchronous>, transform_indices = @transform_2, window_bounds = array<i64: 4, 1>}, {transform_indices = @transform_3, window_bounds = array<i64: 1>}, {transform_indices = @transform_4, window_bounds = array<i64: 4, 512>}, {transform_indices = @transform_5, window_bounds = array<i64: 4, 512>}]} {
    %c0 = arith.constant 0 : index
    %c0_0 = arith.constant 0 : index
    %0 = vector.load %arg2[%c0, %c0_0] : memref<4x32xbf16, #tpu.memory_space<vmem>>, vector<4x32xbf16>
    %c0_1 = arith.constant 0 : index
    %c0_2 = arith.constant 0 : index
    %1 = vector.load %arg1[%c0_1, %c0_2] : memref<32x512xbf16, #tpu.memory_space<vmem>>, vector<32x512xbf16>
    %cst = arith.constant dense<0.000000e+00> : vector<4x512xf32>
    %2 = tpu.matmul %0, %1, %cst {dimension_numbers = #tpu.dot_dimension_numbers<[1], [0], [0], [1], [0, 0, 1, 1], [], []>} : vector<4x32xbf16>, vector<32x512xbf16>, vector<4x512xf32> -> vector<4x512xf32>
    %c0_3 = arith.constant 0 : index
    %c0_4 = arith.constant 0 : index
    %3 = vector.load %arg3[%c0_3, %c0_4] : memref<4x1xf32, #tpu.memory_space<vmem>>, vector<4x1xf32>
    %4 = vector.broadcast %3 : vector<4x1xf32> to vector<4x512xf32>
    %5 = arith.addf %2, %4 : vector<4x512xf32>
    %c0_5 = arith.constant 0 : index
    %6 = memref.load %arg4[%c0_5] : memref<1xf32, #tpu.memory_space<smem>>
    %cst_6 = arith.constant 0.000000e+00 : f32
    %7 = vector.broadcast %cst_6 : f32 to vector<4x512xf32>
    %8 = arith.cmpf oge, %5, %7 : vector<4x512xf32>
    %9 = vector.broadcast %6 : f32 to vector<4x512xf32>
    %10 = arith.mulf %9, %5 : vector<4x512xf32>
    %11 = arith.select %8, %5, %10 : vector<4x512xi1>, vector<4x512xf32>
    %c0_7 = arith.constant 0 : index
    %c0_8 = arith.constant 0 : index
    %12 = vector.load %arg5[%c0_7, %c0_8] : memref<4x512xf32, #tpu.memory_space<vmem>>, vector<4x512xf32>
    %13 = arith.addf %11, %12 : vector<4x512xf32>
    %c0_9 = arith.constant 0 : index
    %c0_10 = arith.constant 0 : index
    %14 = vector.load %arg6[%c0_9, %c0_10] : memref<4x512xf32, #tpu.memory_space<vmem>>, vector<4x512xf32>
    tpu.vector_store %arg6[%c0_9, %c0_10], %13 {strides = array<i32>} : memref<4x512xf32, #tpu.memory_space<vmem>>, vector<4x512xf32>,
    return
  }
  func.func @transform_0(%arg0: i32) -> (i32, i32) {
    %c0_i32 = arith.constant 0 : i32
    %c0_i32_0 = arith.constant 0 : i32
    return %c0_i32, %arg0 : i32, i32
  }
  func.func @transform_1(%arg0: i32) -> (i32, i32) {
    %c0_i32 = arith.constant 0 : i32
    %c0_i32_0 = arith.constant 0 : i32
    %c0_i32_1 = arith.constant 0 : i32
    return %c0_i32, %c0_i32_0 : i32, i32
  }
  func.func @transform_2(%arg0: i32) -> (i32, i32) {
    %c0_i32 = arith.constant 0 : i32
    %c0_i32_0 = arith.constant 0 : i32
    %c0_i32_1 = arith.constant 0 : i32
    return %c0_i32, %c0_i32_0 : i32, i32
  }
  func.func @transform_3(%arg0: i32) -> i32 {
    %c0_i32 = arith.constant 0 : i32
    %c0_i32_0 = arith.constant 0 : i32
    return %c0_i32 : i32
  }
  func.func @transform_4(%arg0: i32) -> (i32, i32) {
    %c0_i32 = arith.constant 0 : i32
    %c0_i32_0 = arith.constant 0 : i32
    return %c0_i32, %arg0 : i32, i32
  }
  func.func @transform_5(%arg0: i32) -> (i32, i32) {
    %c0_i32 = arith.constant 0 : i32
    %c0_i32_0 = arith.constant 0 : i32
    return %c0_i32, %arg0 : i32, i32
  }
}

module attributes {stable_mosaic.version = 11 : i64} {
  func.func @_gemm_bias_prelu_res_kernel(%arg0: i32, %arg1: memref<64x128xbf16, #tpu.memory_space<vmem>>, %arg2: memref<8x64xbf16, #tpu.memory_space<vmem>>, %arg3: memref<8x1xf32, #tpu.memory_space<vmem>>, %arg4: memref<1xf32, #tpu.memory_space<smem>>, %arg5: memref<8x128xf32, #tpu.memory_space<vmem>>, %arg6: memref<8x128xf32, #tpu.memory_space<vmem>>) attributes {dimension_semantics = [#tpu.dimension_semantics<parallel>], iteration_bounds = array<i64: 1>, scalar_prefetch = 0 : i64, scratch_operands = 0 : i64, tpu.core_type = #tpu.core_type<tc>, window_params = [{transform_indices = @transform_0, window_bounds = array<i64: 64, 128>}, {pipeline_mode = #tpu.pipeline_mode<synchronous>, transform_indices = @transform_1, window_bounds = array<i64: 8, 64>}, {pipeline_mode = #tpu.pipeline_mode<synchronous>, transform_indices = @transform_2, window_bounds = array<i64: 8, 1>}, {transform_indices = @transform_3, window_bounds = array<i64: 1>}, {transform_indices = @transform_4, window_bounds = array<i64: 8, 128>}, {transform_indices = @transform_5, window_bounds = array<i64: 8, 128>}]} {
    %c0 = arith.constant 0 : index
    %c0_0 = arith.constant 0 : index
    %0 = vector.load %arg2[%c0, %c0_0] : memref<8x64xbf16, #tpu.memory_space<vmem>>, vector<8x64xbf16>
    %c0_1 = arith.constant 0 : index
    %c0_2 = arith.constant 0 : index
    %1 = vector.load %arg1[%c0_1, %c0_2] : memref<64x128xbf16, #tpu.memory_space<vmem>>, vector<64x128xbf16>
    %cst = arith.constant dense<0.000000e+00> : vector<8x128xf32>
    %2 = tpu.matmul %0, %1, %cst {dimension_numbers = #tpu.dot_dimension_numbers<[1], [0], [0], [1], [0, 0, 1, 1], [], []>} : vector<8x64xbf16>, vector<64x128xbf16>, vector<8x128xf32> -> vector<8x128xf32>
    %c0_3 = arith.constant 0 : index
    %c0_4 = arith.constant 0 : index
    %3 = vector.load %arg3[%c0_3, %c0_4] : memref<8x1xf32, #tpu.memory_space<vmem>>, vector<8x1xf32>
    %4 = vector.broadcast %3 : vector<8x1xf32> to vector<8x128xf32>
    %5 = arith.addf %2, %4 : vector<8x128xf32>
    %c0_5 = arith.constant 0 : index
    %6 = memref.load %arg4[%c0_5] : memref<1xf32, #tpu.memory_space<smem>>
    %cst_6 = arith.constant 0.000000e+00 : f32
    %7 = vector.broadcast %cst_6 : f32 to vector<8x128xf32>
    %8 = arith.cmpf oge, %5, %7 : vector<8x128xf32>
    %9 = vector.broadcast %6 : f32 to vector<8x128xf32>
    %10 = arith.mulf %9, %5 : vector<8x128xf32>
    %11 = arith.select %8, %5, %10 : vector<8x128xi1>, vector<8x128xf32>
    %c0_7 = arith.constant 0 : index
    %c0_8 = arith.constant 0 : index
    %12 = vector.load %arg5[%c0_7, %c0_8] : memref<8x128xf32, #tpu.memory_space<vmem>>, vector<8x128xf32>
    %13 = arith.addf %11, %12 : vector<8x128xf32>
    %c0_9 = arith.constant 0 : index
    %c0_10 = arith.constant 0 : index
    %14 = vector.load %arg6[%c0_9, %c0_10] : memref<8x128xf32, #tpu.memory_space<vmem>>, vector<8x128xf32>
    tpu.vector_store %arg6[%c0_9, %c0_10], %13 {strides = array<i32>} : memref<8x128xf32, #tpu.memory_space<vmem>>, vector<8x128xf32>,
    return
  }
  func.func @transform_0(%arg0: i32) -> (i32, i32) {
    %c0_i32 = arith.constant 0 : i32
    %c0_i32_0 = arith.constant 0 : i32
    return %c0_i32, %arg0 : i32, i32
  }
  func.func @transform_1(%arg0: i32) -> (i32, i32) {
    %c0_i32 = arith.constant 0 : i32
    %c0_i32_0 = arith.constant 0 : i32
    %c0_i32_1 = arith.constant 0 : i32
    return %c0_i32, %c0_i32_0 : i32, i32
  }
  func.func @transform_2(%arg0: i32) -> (i32, i32) {
    %c0_i32 = arith.constant 0 : i32
    %c0_i32_0 = arith.constant 0 : i32
    %c0_i32_1 = arith.constant 0 : i32
    return %c0_i32, %c0_i32_0 : i32, i32
  }
  func.func @transform_3(%arg0: i32) -> i32 {
    %c0_i32 = arith.constant 0 : i32
    %c0_i32_0 = arith.constant 0 : i32
    return %c0_i32 : i32
  }
  func.func @transform_4(%arg0: i32) -> (i32, i32) {
    %c0_i32 = arith.constant 0 : i32
    %c0_i32_0 = arith.constant 0 : i32
    return %c0_i32, %arg0 : i32, i32
  }
  func.func @transform_5(%arg0: i32) -> (i32, i32) {
    %c0_i32 = arith.constant 0 : i32
    %c0_i32_0 = arith.constant 0 : i32
    return %c0_i32, %arg0 : i32, i32
  }
}

</mosaic_0001>

<llo_original>
// kernel: tile.13
$region0: #{tile.13}
  #allocation0 [shape = 's32[1]{0}', space=sflag, size = 0x4, scoped, tag = 'scoped memory for tile.13']
  %s0 = inlined_call_operand.vmem [shape: f32[4], index: 0, kind: input, shape index: {}]
  %s1 = inlined_call_operand.vmem [shape: f32[4,4], index: 1, kind: output, shape index: {}]
  // Predicated region
  $region2: #{tile.13} parent=0 // pred_check
    _
  $region3: #{tile.13} parent=0 // pred_check_branch
    %3 = sbr.rel (0) target = $region5
  $region4: #{tile.13} parent=0 // pred_region
    _
  $region5: #{tile.13} parent=0 // pred_fallthru
    _
  %v4 = vld [vmem:[%s0] ss:$0 sm:$0xff]
  %5 = vst [vmem:[%s1] sm:$0xf] %v4

// kernel: tile.18
$region0: #{tile.18}
  #allocation0 [shape = 's32[1]{0}', space=sflag, size = 0x4, scoped, tag = 'scoped memory for tile.18']
  %s0 = inlined_call_operand.vmem [shape: f32[2], index: 0, kind: input, shape index: {}]
  %s1 = inlined_call_operand.vmem [shape: f32[4,2], index: 1, kind: output, shape index: {}]
  // Predicated region
  $region2: #{tile.18} parent=0 // pred_check
    _
  $region3: #{tile.18} parent=0 // pred_check_branch
    %3 = sbr.rel (0) target = $region5
  $region4: #{tile.18} parent=0 // pred_region
    _
  $region5: #{tile.18} parent=0 // pred_fallthru
    _
  %v4 = vld [vmem:[%s0] ss:$0 sm:$0xff]
  %5 = vst [vmem:[%s1] sm:$0xf] %v4

// kernel: tile.1
$region0: #{tile.1}
  %s0 = inlined_call_operand.vmem [shape: f32[4,2], index: 0, kind: input, shape index: {}]
  %s1 = inlined_call_operand.vmem [shape: f32[8,1], index: 1, kind: output, shape index: {}]
  $region1: #{tile.1} parent=0
    #allocation0 [shape = 'u8[4096]{0}', space=vmem, size = 0x1000, scoped, tag = 'scoped mem for input reshape']
    %s3 = sshllo.u32 0, 4
    %v4 = vld [vmem:[%s0] sm:%s3]
    %5 = vst [vmem:[#allocation0] sm:%s3] %v4
    %v6 = vld [vmem:[#allocation0] sm:$0xf]
    %vm7 = vcmask 7168
    %8 = vst.msk [vmem:[%s1] ss:$2 sm:$0xf] %vm7, %v6
    %v9 = vld [vmem:[#allocation0] sm:$0xf]
    %10 = vrot.lane.b32.xlu0 %v9, 127
    %v11 = vpop.permute.xlu0 %10
    %vm12 = vcmask 7168
    %s13 = scalar_lea.vmem %s1, 1
    %14 = vst.msk [vmem:[%s13] ss:$2 sm:$0xf] %vm12, %v11

// kernel: tile.0
$region0: #{tile.0}
  %s0 = inlined_call_operand.vmem [shape: f32[4,4], index: 0, kind: input, shape index: {}]
  %s1 = inlined_call_operand.vmem [shape: f32[16,1], index: 1, kind: output, shape index: {}]
  $region1: #{tile.0} parent=0
    #allocation0 [shape = 'u8[4096]{0}', space=vmem, size = 0x1000, scoped, tag = 'scoped mem for input reshape']
    %s3 = sshllo.u32 0, 4
    %v4 = vld [vmem:[%s0] sm:%s3]
    %5 = vst [vmem:[#allocation0] sm:%s3] %v4
    %v6 = vld [vmem:[#allocation0] sm:$0xf]
    %vm7 = vcmask 7168
    %8 = vst.msk [vmem:[%s1] ss:$4 sm:$0xf] %vm7, %v6
    %v9 = vld [vmem:[#allocation0] sm:$0xf]
    %10 = vrot.lane.b32.xlu0 %v9, 127
    %v11 = vpop.permute.xlu0 %10
    %vm12 = vcmask 7168
    %s13 = scalar_lea.vmem %s1, 1
    %14 = vst.msk [vmem:[%s13] ss:$4 sm:$0xf] %vm12, %v11
    %v15 = vld [vmem:[#allocation0] sm:$0xf]
    %16 = vrot.lane.b32.xlu0 %v15, 126
    %v17 = vpop.permute.xlu0 %16
    %vm18 = vcmask 7168
    %s19 = scalar_lea.vmem %s1, 2
    %20 = vst.msk [vmem:[%s19] ss:$4 sm:$0xf] %vm18, %v17
    %v21 = vld [vmem:[#allocation0] sm:$0xf]
    %22 = vrot.lane.b32.xlu0 %v21, 125
    %v23 = vpop.permute.xlu0 %22
    %vm24 = vcmask 7168
    %s25 = scalar_lea.vmem %s1, 3
    %26 = vst.msk [vmem:[%s25] ss:$4 sm:$0xf] %vm24, %v23

// kernel: encoder_mdcblock1_forward.4
$region0: #{encoder_mdcblock1_forward.4}
  #allocation0 [shape = 'u32[]', space=smem, size = 0x4, offset = 0x4, fixed_abs, tag = 'smem constant byte address 0x4 - core index']
  #allocation1 [shape = 'u32[144,128]{1,0:T(1,128)}', space=vmem, size = 0x12000, scoped, tag = 'internal scratch']
  #allocation2 [shape = 'f32[1]{0:T(128)S(6)}', space=smem, size = 0x200, scoped, tag = 'scoped memory for encoder_mdcblock1_forward.4']
  %s0 = inlined_call_operand.vmem [shape: bf16[72,128], index: 0, kind: input, shape index: {}]
  %s1 = inlined_call_operand.vmem [shape: bf16[16,72], index: 1, kind: input, shape index: {}]
  %s2 = inlined_call_operand.vmem [shape: f32[16,1], index: 2, kind: input, shape index: {}]
  %s3 = inlined_call_operand.<no memory space> [shape: f32[1], index: 3, kind: input, shape index: {}]
  %s4 = inlined_call_operand.vmem [shape: f32[16,128], index: 4, kind: output, shape index: {}]
  %s5 = sld [smem:[#allocation0]]
  $region26: #{encoder_mdcblock1_forward.4} parent=0
    _
  %s7 = ssub.s32 1, %s5
  %s8 = scalar_select 0, %s7, %s5
  %9 = sst [smem:[#allocation2]] %s3
  // Predicated region
  $region2: #{encoder_mdcblock1_forward.4} parent=0 // pred_check
    _
  $region3: #{encoder_mdcblock1_forward.4} parent=0 // pred_check_branch
    %11 = sbr.rel (0) target = $region5
  $region4: #{encoder_mdcblock1_forward.4} parent=0 // pred_region
    _
  $region5: #{encoder_mdcblock1_forward.4} parent=0 // pred_fallthru
    _
  // Predicated region
  $region6: #{encoder_mdcblock1_forward.4} parent=0 // pred_check
    _
  $region7: #{encoder_mdcblock1_forward.4} parent=0 // pred_check_branch
    %13 = sbr.rel (0) target = $region9
  $region8: #{encoder_mdcblock1_forward.4} parent=0 // pred_region
    _
  $region9: #{encoder_mdcblock1_forward.4} parent=0 // pred_fallthru
    _
  // Predicated region
  $region10: #{encoder_mdcblock1_forward.4} parent=0 // pred_check
    _
  $region11: #{encoder_mdcblock1_forward.4} parent=0 // pred_check_branch
    %15 = sbr.rel (0) target = $region13
  $region12: #{encoder_mdcblock1_forward.4} parent=0 // pred_region
    _
  $region13: #{encoder_mdcblock1_forward.4} parent=0 // pred_fallthru
    _
  // Predicated region
  $region14: #{encoder_mdcblock1_forward.4} parent=0 // pred_check
    _
  $region15: #{encoder_mdcblock1_forward.4} parent=0 // pred_check_branch
    %17 = sbr.rel (0) target = $region17
  $region16: #{encoder_mdcblock1_forward.4} parent=0 // pred_region
    _
  $region17: #{encoder_mdcblock1_forward.4} parent=0 // pred_fallthru
    _
  %v19 = vld [vmem:[%s1] sm:$0xf]
  %v20 = vld [vmem:[%s1 + $0x4] sm:$0xf]
  %v21 = vld [vmem:[%s0] sm:$0xf]
  %v22 = vld [vmem:[%s0 + $0x4] sm:$0xf]
  %v23 = vld [vmem:[%s0 + $0x8] sm:$0xf]
  %v24 = vld [vmem:[%s0 + $0xc] sm:$0xf]
  %v25 = vld [vmem:[%s0 + $0x10] sm:$0xf]
  %v26 = vld [vmem:[%s0 + $0x14] sm:$0xf]
  %v27 = vld [vmem:[%s0 + $0x18] sm:$0xf]
  %v28 = vld [vmem:[%s0 + $0x1c] sm:$0xf]
  %v29 = vld [vmem:[%s0 + $0x20] sm:$0xf]
  %v30 = vld [vmem:[%s2] sm:$0xff]
  %v31 = vld [vmem:[%s2 + $0x8] sm:$0xff]
  %33 = vset.pattern.permute.xlu0 0
  %34 = vperm.xlu0 %33, %v30
  %v35 = vpop.permute.xlu0 %34
  %38 = vset.pattern.permute.xlu0 0
  %39 = vperm.xlu0 %38, %v31
  %v40 = vpop.permute.xlu0 %39
  %v44 = vunpack.c.l.b16 %v19
  %v45 = vunpack.c.l.b16 %v20
  %v46 = vpack.c.b16 %v45, %v44
  %v56 = vunpack.c.l.b16 %v21
  %v57 = vunpack.c.l.b16 %v22
  %v58 = vunpack.c.l.b16 %v23
  %v59 = vunpack.c.l.b16 %v24
  %v60 = vunpack.c.l.b16 %v25
  %v61 = vunpack.c.l.b16 %v26
  %v62 = vunpack.c.l.b16 %v27
  %v63 = vunpack.c.l.b16 %v28
  %v64 = vunpack.c.l.b16 %v29
  %v65 = vpack.c.b16 %v57, %v56
  %v66 = vpack.c.b16 %v59, %v58
  %v67 = vpack.c.b16 %v61, %v60
  %v68 = vpack.c.b16 %v63, %v62
  %v69 = vpack.c.b16 %v64, %v64
  %vm74 = vcmask 588800
  %v76 = vsel %vm74, %v46, 0
  %vm78 = vcmask 1043456
  %v80 = vsel %vm78, %v69, 0
  %82 = vmatprep.subr.bf16.mxu0 0
  %83 = vmatpush1.bf16.msra.mxu0 %v65
  %84 = vmatprep.subr.bf16.mxu0 0
  %85 = vmatpush1.bf16.msra.mxu0 %v66
  %86 = vmatprep.subr.bf16.mxu0 0
  %87 = vmatpush1.bf16.msra.mxu0 %v67
  %88 = vmatprep.subr.bf16.mxu0 0
  %89 = vmatpush1.bf16.msra.mxu0 %v68
  %90 = vmatprep.subr.bf16.mxu0 0
  %91 = vmatpush1.bf16.msra.mxu0 %v80
  %92 = vmatprep.subr.bf16.mxu0 0
  %93 = vmatpush1.bf16.msra.mxu0 0
  %94 = vmatprep.subr.bf16.mxu0 0
  %95 = vmatpush1.bf16.msra.mxu0 0
  %96 = vmatprep.subr.bf16.mxu0 0
  %97 = vmatpush1.bf16.msra.mxu0 0
  %98 = vmatprep.subr.bf16.mxu0 0
  %99 = vmatpush1.bf16.msra.mxu0 0
  %100 = vmatprep.subr.bf16.mxu0 0
  %101 = vmatpush1.bf16.msra.mxu0 0
  %102 = vmatprep.subr.bf16.mxu0 0
  %103 = vmatpush1.bf16.msra.mxu0 0
  %104 = vmatprep.subr.bf16.mxu0 0
  %105 = vmatpush1.bf16.msra.mxu0 0
  %106 = vmatprep.subr.bf16.mxu0 0
  %107 = vmatpush1.bf16.msra.mxu0 0
  %108 = vmatprep.subr.bf16.mxu0 0
  %109 = vmatpush1.bf16.msra.mxu0 0
  %110 = vmatprep.subr.bf16.mxu0 0
  %111 = vmatpush1.bf16.msra.mxu0 0
  %112 = vmatprep.subr.bf16.mxu0 0
  %113 = vmatpush1.bf16.msra.mxu0 0
  %114 = vmatprep.mubr.bf16.mxu0 0
  %115 = vmatmul.mubr.bf16.gmra.mrb[0].mxu0 %v76
  %v116 = vpop.f32.mrb[0].mxu0
  %v117 = vadd.f32 %v35, %v116
  %v118 = vpop.f32.mrb[0].mxu0
  %v119 = vpop.f32.mrb[0].mxu0
  %v120 = vadd.f32 %v40, %v119
  %v121 = vpop.f32.mrb[0].mxu0
  %122 = vdwg.mxu0
  %s123 = sld [smem:[#allocation2]]
  %vm124 = vcmp.ge.f32.partialorder %v117, 0.0
  %vm125 = vcmp.ge.f32.partialorder %v120, 0.0
  %v126 = vstv %s123
  %v127 = vmul.f32 %v126, %v117
  %v128 = vmul.f32 %v126, %v120
  %v129 = vsel %vm124, %v117, %v127
  %v130 = vsel %vm125, %v120, %v128
  %131 = vst [vmem:[%s4] sm:$0xff] %v129
  %132 = vst [vmem:[%s4 + $0x8] sm:$0xff] %v130
  // Predicated region
  $region18: #{encoder_mdcblock1_forward.4} parent=0 // pred_check
    _
  $region19: #{encoder_mdcblock1_forward.4} parent=0 // pred_check_branch
    %134 = sbr.rel (0) target = $region21
  $region20: #{encoder_mdcblock1_forward.4} parent=0 // pred_region
    _
  $region21: #{encoder_mdcblock1_forward.4} parent=0 // pred_fallthru
    _
  // Predicated region
  $region22: #{encoder_mdcblock1_forward.4} parent=0 // pred_check
    _
  $region23: #{encoder_mdcblock1_forward.4} parent=0 // pred_check_branch
    %136 = sbr.rel (0) target = $region25
  $region24: #{encoder_mdcblock1_forward.4} parent=0 // pred_region
    _
  $region25: #{encoder_mdcblock1_forward.4} parent=0 // pred_fallthru
    _

// kernel: encoder_mdcblock1_forward.5
$region0: #{encoder_mdcblock1_forward.5}
  #allocation0 [shape = 'u32[]', space=smem, size = 0x4, offset = 0x4, fixed_abs, tag = 'smem constant byte address 0x4 - core index']
  #allocation1 [shape = 'u32[144,128]{1,0:T(1,128)}', space=vmem, size = 0x12000, scoped, tag = 'internal scratch']
  #allocation2 [shape = 'f32[1]{0:T(128)S(6)}', space=smem, size = 0x200, scoped, tag = 'scoped memory for encoder_mdcblock1_forward.5']
  %s0 = inlined_call_operand.vmem [shape: bf16[36,512], index: 0, kind: input, shape index: {}]
  %s1 = inlined_call_operand.vmem [shape: bf16[8,36], index: 1, kind: input, shape index: {}]
  %s2 = inlined_call_operand.vmem [shape: f32[8,1], index: 2, kind: input, shape index: {}]
  %s3 = inlined_call_operand.<no memory space> [shape: f32[1], index: 3, kind: input, shape index: {}]
  %s4 = inlined_call_operand.vmem [shape: f32[8,512], index: 4, kind: output, shape index: {}]
  %s5 = sld [smem:[#allocation0]]
  $region26: #{encoder_mdcblock1_forward.5} parent=0
    _
  %s7 = ssub.s32 1, %s5
  %s8 = scalar_select 0, %s7, %s5
  %9 = sst [smem:[#allocation2]] %s3
  // Predicated region
  $region2: #{encoder_mdcblock1_forward.5} parent=0 // pred_check
    _
  $region3: #{encoder_mdcblock1_forward.5} parent=0 // pred_check_branch
    %11 = sbr.rel (0) target = $region5
  $region4: #{encoder_mdcblock1_forward.5} parent=0 // pred_region
    _
  $region5: #{encoder_mdcblock1_forward.5} parent=0 // pred_fallthru
    _
  // Predicated region
  $region6: #{encoder_mdcblock1_forward.5} parent=0 // pred_check
    _
  $region7: #{encoder_mdcblock1_forward.5} parent=0 // pred_check_branch
    %13 = sbr.rel (0) target = $region9
  $region8: #{encoder_mdcblock1_forward.5} parent=0 // pred_region
    _
  $region9: #{encoder_mdcblock1_forward.5} parent=0 // pred_fallthru
    _
  // Predicated region
  $region10: #{encoder_mdcblock1_forward.5} parent=0 // pred_check
    _
  $region11: #{encoder_mdcblock1_forward.5} parent=0 // pred_check_branch
    %15 = sbr.rel (0) target = $region13
  $region12: #{encoder_mdcblock1_forward.5} parent=0 // pred_region
    _
  $region13: #{encoder_mdcblock1_forward.5} parent=0 // pred_fallthru
    _
  // Predicated region
  $region14: #{encoder_mdcblock1_forward.5} parent=0 // pred_check
    _
  $region15: #{encoder_mdcblock1_forward.5} parent=0 // pred_check_branch
    %17 = sbr.rel (0) target = $region17
  $region16: #{encoder_mdcblock1_forward.5} parent=0 // pred_region
    _
  $region17: #{encoder_mdcblock1_forward.5} parent=0 // pred_fallthru
    _
  %v19 = vld [vmem:[%s1] sm:$0xf]
  %v20 = vld [vmem:[%s0] sm:$0xff]
  %v21 = vld [vmem:[%s0 + $0x8] sm:$0xff]
  %v22 = vld [vmem:[%s0 + $0x10] sm:$0xff]
  %v23 = vld [vmem:[%s0 + $0x18] sm:$0xff]
  %v24 = vld [vmem:[%s0 + $0x20] sm:$0xff]
  %v25 = vld [vmem:[%s0 + $0x28] sm:$0xff]
  %v26 = vld [vmem:[%s0 + $0x30] sm:$0xff]
  %v27 = vld [vmem:[%s0 + $0x38] sm:$0xff]
  %v28 = vld [vmem:[%s0 + $0x40] sm:$0x33]
  %v29 = vld [vmem:[%s0 + $0x48] sm:$0x33]
  %v30 = vld [vmem:[%s2] sm:$0xff]
  %32 = vset.pattern.permute.xlu0 0
  %33 = vperm.xlu0 %32, %v30
  %v34 = vpop.permute.xlu0 %33
  %v46 = vunpack.c.l.b16 %v20
  %v47 = vunpack.c.h.b16 %v20
  %v48 = vunpack.c.l.b16 %v21
  %v49 = vunpack.c.h.b16 %v21
  %v50 = vunpack.c.l.b16 %v22
  %v51 = vunpack.c.h.b16 %v22
  %v52 = vunpack.c.l.b16 %v23
  %v53 = vunpack.c.h.b16 %v23
  %v54 = vunpack.c.l.b16 %v24
  %v55 = vunpack.c.h.b16 %v24
  %v56 = vunpack.c.l.b16 %v25
  %v57 = vunpack.c.h.b16 %v25
  %v58 = vunpack.c.l.b16 %v26
  %v59 = vunpack.c.h.b16 %v26
  %v60 = vunpack.c.l.b16 %v27
  %v61 = vunpack.c.h.b16 %v27
  %v62 = vunpack.c.l.b16 %v28
  %v63 = vunpack.c.h.b16 %v28
  %v64 = vunpack.c.l.b16 %v29
  %v65 = vunpack.c.h.b16 %v29
  %v66 = vpack.c.b16 %v50, %v46
  %v67 = vpack.c.b16 %v51, %v47
  %v68 = vpack.c.b16 %v52, %v48
  %v69 = vpack.c.b16 %v53, %v49
  %v70 = vpack.c.b16 %v58, %v54
  %v71 = vpack.c.b16 %v59, %v55
  %v72 = vpack.c.b16 %v60, %v56
  %v73 = vpack.c.b16 %v61, %v57
  %v74 = vpack.c.b16 %v62, %v62
  %v75 = vpack.c.b16 %v63, %v63
  %v76 = vpack.c.b16 %v64, %v64
  %v77 = vpack.c.b16 %v65, %v65
  %vm86 = vcmask 293888
  %v88 = vsel %vm86, %v19, 0
  %vm90 = vcmask 1041408
  %v92 = vsel %vm90, %v74, 0
  %v95 = vsel %vm90, %v75, 0
  %v98 = vsel %vm90, %v76, 0
  %v101 = vsel %vm90, %v77, 0
  %103 = vmatprep.subr.bf16.mxu0 %v67
  %104 = vmatpush1.bf16.msra.mxu0 %v66
  %105 = vmatprep.subr.bf16.mxu0 %v71
  %106 = vmatpush1.bf16.msra.mxu0 %v70
  %107 = vmatprep.subr.bf16.mxu0 %v95
  %108 = vmatpush1.bf16.msra.mxu0 %v92
  %109 = vmatprep.subr.bf16.mxu0 0
  %110 = vmatpush1.bf16.msra.mxu0 0
  %111 = vmatprep.subr.bf16.mxu0 0
  %112 = vmatpush1.bf16.msra.mxu0 0
  %113 = vmatprep.subr.bf16.mxu0 0
  %114 = vmatpush1.bf16.msra.mxu0 0
  %115 = vmatprep.subr.bf16.mxu0 0
  %116 = vmatpush1.bf16.msra.mxu0 0
  %117 = vmatprep.subr.bf16.mxu0 0
  %118 = vmatpush1.bf16.msra.mxu0 0
  %119 = vmatprep.subr.bf16.mxu0 0
  %120 = vmatpush1.bf16.msra.mxu0 0
  %121 = vmatprep.subr.bf16.mxu0 0
  %122 = vmatpush1.bf16.msra.mxu0 0
  %123 = vmatprep.subr.bf16.mxu0 0
  %124 = vmatpush1.bf16.msra.mxu0 0
  %125 = vmatprep.subr.bf16.mxu0 0
  %126 = vmatpush1.bf16.msra.mxu0 0
  %127 = vmatprep.subr.bf16.mxu0 0
  %128 = vmatpush1.bf16.msra.mxu0 0
  %129 = vmatprep.subr.bf16.mxu0 0
  %130 = vmatpush1.bf16.msra.mxu0 0
  %131 = vmatprep.subr.bf16.mxu0 0
  %132 = vmatpush1.bf16.msra.mxu0 0
  %133 = vmatprep.subr.bf16.mxu0 0
  %134 = vmatpush1.bf16.msra.mxu0 0
  %135 = vmatprep.mubr.bf16.mxu0 0
  %136 = vmatmul.mubr.bf16.gmra.mrb[0].mxu0 %v88
  %v137 = vpop.f32.mrb[0].mxu0
  %v138 = vadd.f32 %v34, %v137
  %v139 = vpop.f32.mrb[0].mxu0
  %v140 = vadd.f32 %v34, %v139
  %v141 = vpop.f32.mrb[0].mxu0
  %v142 = vpop.f32.mrb[0].mxu0
  %143 = vdwg.mxu0
  %144 = vmatprep.subr.bf16.mxu0 %v69
  %145 = vmatpush1.bf16.msra.mxu0 %v68
  %146 = vmatprep.subr.bf16.mxu0 %v73
  %147 = vmatpush1.bf16.msra.mxu0 %v72
  %148 = vmatprep.subr.bf16.mxu0 %v101
  %149 = vmatpush1.bf16.msra.mxu0 %v98
  %150 = vmatprep.subr.bf16.mxu0 0
  %151 = vmatpush1.bf16.msra.mxu0 0
  %152 = vmatprep.subr.bf16.mxu0 0
  %153 = vmatpush1.bf16.msra.mxu0 0
  %154 = vmatprep.subr.bf16.mxu0 0
  %155 = vmatpush1.bf16.msra.mxu0 0
  %156 = vmatprep.subr.bf16.mxu0 0
  %157 = vmatpush1.bf16.msra.mxu0 0
  %158 = vmatprep.subr.bf16.mxu0 0
  %159 = vmatpush1.bf16.msra.mxu0 0
  %160 = vmatprep.subr.bf16.mxu0 0
  %161 = vmatpush1.bf16.msra.mxu0 0
  %162 = vmatprep.subr.bf16.mxu0 0
  %163 = vmatpush1.bf16.msra.mxu0 0
  %164 = vmatprep.subr.bf16.mxu0 0
  %165 = vmatpush1.bf16.msra.mxu0 0
  %166 = vmatprep.subr.bf16.mxu0 0
  %167 = vmatpush1.bf16.msra.mxu0 0
  %168 = vmatprep.subr.bf16.mxu0 0
  %169 = vmatpush1.bf16.msra.mxu0 0
  %170 = vmatprep.subr.bf16.mxu0 0
  %171 = vmatpush1.bf16.msra.mxu0 0
  %172 = vmatprep.subr.bf16.mxu0 0
  %173 = vmatpush1.bf16.msra.mxu0 0
  %174 = vmatprep.subr.bf16.mxu0 0
  %175 = vmatpush1.bf16.msra.mxu0 0
  %176 = vmatprep.mubr.bf16.mxu0 0
  %177 = vmatmul.mubr.bf16.gmra.mrb[0].mxu0 %v88
  %v178 = vpop.f32.mrb[0].mxu0
  %v179 = vadd.f32 %v34, %v178
  %v180 = vpop.f32.mrb[0].mxu0
  %v181 = vadd.f32 %v34, %v180
  %v182 = vpop.f32.mrb[0].mxu0
  %v183 = vpop.f32.mrb[0].mxu0
  %184 = vdwg.mxu0
  %s185 = sld [smem:[#allocation2]]
  %vm186 = vcmp.ge.f32.partialorder %v138, 0.0
  %vm187 = vcmp.ge.f32.partialorder %v140, 0.0
  %vm188 = vcmp.ge.f32.partialorder %v179, 0.0
  %vm189 = vcmp.ge.f32.partialorder %v181, 0.0
  %v190 = vstv %s185
  %v191 = vmul.f32 %v190, %v138
  %v192 = vmul.f32 %v190, %v140
  %v193 = vmul.f32 %v190, %v179
  %v194 = vmul.f32 %v190, %v181
  %v195 = vsel %vm186, %v138, %v191
  %v196 = vsel %vm187, %v140, %v192
  %v197 = vsel %vm188, %v179, %v193
  %v198 = vsel %vm189, %v181, %v194
  %199 = vst [vmem:[%s4] sm:$0xff] %v195
  %200 = vst [vmem:[%s4 + $0x8] sm:$0xff] %v196
  %201 = vst [vmem:[%s4 + $0x10] sm:$0xff] %v197
  %202 = vst [vmem:[%s4 + $0x18] sm:$0xff] %v198
  // Predicated region
  $region18: #{encoder_mdcblock1_forward.5} parent=0 // pred_check
    _
  $region19: #{encoder_mdcblock1_forward.5} parent=0 // pred_check_branch
    %204 = sbr.rel (0) target = $region21
  $region20: #{encoder_mdcblock1_forward.5} parent=0 // pred_region
    _
  $region21: #{encoder_mdcblock1_forward.5} parent=0 // pred_fallthru
    _
  // Predicated region
  $region22: #{encoder_mdcblock1_forward.5} parent=0 // pred_check
    _
  $region23: #{encoder_mdcblock1_forward.5} parent=0 // pred_check_branch
    %206 = sbr.rel (0) target = $region25
  $region24: #{encoder_mdcblock1_forward.5} parent=0 // pred_region
    _
  $region25: #{encoder_mdcblock1_forward.5} parent=0 // pred_fallthru
    _

// kernel: encoder_mdcblock1_forward.6
$region0: #{encoder_mdcblock1_forward.6}
  #allocation0 [shape = 'u32[]', space=smem, size = 0x4, offset = 0x4, fixed_abs, tag = 'smem constant byte address 0x4 - core index']
  #allocation1 [shape = 'u32[144,128]{1,0:T(1,128)}', space=vmem, size = 0x12000, scoped, tag = 'internal scratch']
  #allocation2 [shape = 'f32[1]{0:T(128)S(6)}', space=smem, size = 0x200, scoped, tag = 'scoped memory for encoder_mdcblock1_forward.6']
  %s0 = inlined_call_operand.vmem [shape: bf16[32,512], index: 0, kind: input, shape index: {}]
  %s1 = inlined_call_operand.vmem [shape: bf16[4,32], index: 1, kind: input, shape index: {}]
  %s2 = inlined_call_operand.vmem [shape: f32[4,1], index: 2, kind: input, shape index: {}]
  %s3 = inlined_call_operand.<no memory space> [shape: f32[1], index: 3, kind: input, shape index: {}]
  %s4 = inlined_call_operand.vmem [shape: f32[4,512], index: 4, kind: input, shape index: {}]
  %s5 = inlined_call_operand.vmem [shape: f32[4,512], index: 5, kind: output, shape index: {}]
  %s6 = sld [smem:[#allocation0]]
  $region30: #{encoder_mdcblock1_forward.6} parent=0
    _
  %s8 = ssub.s32 1, %s6
  %s9 = scalar_select 0, %s8, %s6
  %10 = sst [smem:[#allocation2]] %s3
  // Predicated region
  $region2: #{encoder_mdcblock1_forward.6} parent=0 // pred_check
    _
  $region3: #{encoder_mdcblock1_forward.6} parent=0 // pred_check_branch
    %12 = sbr.rel (0) target = $region5
  $region4: #{encoder_mdcblock1_forward.6} parent=0 // pred_region
    _
  $region5: #{encoder_mdcblock1_forward.6} parent=0 // pred_fallthru
    _
  // Predicated region
  $region6: #{encoder_mdcblock1_forward.6} parent=0 // pred_check
    _
  $region7: #{encoder_mdcblock1_forward.6} parent=0 // pred_check_branch
    %14 = sbr.rel (0) target = $region9
  $region8: #{encoder_mdcblock1_forward.6} parent=0 // pred_region
    _
  $region9: #{encoder_mdcblock1_forward.6} parent=0 // pred_fallthru
    _
  // Predicated region
  $region10: #{encoder_mdcblock1_forward.6} parent=0 // pred_check
    _
  $region11: #{encoder_mdcblock1_forward.6} parent=0 // pred_check_branch
    %16 = sbr.rel (0) target = $region13
  $region12: #{encoder_mdcblock1_forward.6} parent=0 // pred_region
    _
  $region13: #{encoder_mdcblock1_forward.6} parent=0 // pred_fallthru
    _
  // Predicated region
  $region14: #{encoder_mdcblock1_forward.6} parent=0 // pred_check
    _
  $region15: #{encoder_mdcblock1_forward.6} parent=0 // pred_check_branch
    %18 = sbr.rel (0) target = $region17
  $region16: #{encoder_mdcblock1_forward.6} parent=0 // pred_region
    _
  $region17: #{encoder_mdcblock1_forward.6} parent=0 // pred_fallthru
    _
  // Predicated region
  $region18: #{encoder_mdcblock1_forward.6} parent=0 // pred_check
    _
  $region19: #{encoder_mdcblock1_forward.6} parent=0 // pred_check_branch
    %20 = sbr.rel (0) target = $region21
  $region20: #{encoder_mdcblock1_forward.6} parent=0 // pred_region
    _
  $region21: #{encoder_mdcblock1_forward.6} parent=0 // pred_fallthru
    _
  %v22 = vld [vmem:[%s1] sm:$0x3]
  %v23 = vld [vmem:[%s0] sm:$0xff]
  %v24 = vld [vmem:[%s0 + $0x8] sm:$0xff]
  %v25 = vld [vmem:[%s0 + $0x10] sm:$0xff]
  %v26 = vld [vmem:[%s0 + $0x18] sm:$0xff]
  %v27 = vld [vmem:[%s0 + $0x20] sm:$0xff]
  %v28 = vld [vmem:[%s0 + $0x28] sm:$0xff]
  %v29 = vld [vmem:[%s0 + $0x30] sm:$0xff]
  %v30 = vld [vmem:[%s0 + $0x38] sm:$0xff]
  %v31 = vld [vmem:[%s2] sm:$0xf]
  %33 = vset.pattern.permute.xlu0 0
  %34 = vperm.xlu0 %33, %v31
  %v35 = vpop.permute.xlu0 %34
  %v45 = vunpack.c.l.b16 %v23
  %v46 = vunpack.c.h.b16 %v23
  %v47 = vunpack.c.l.b16 %v24
  %v48 = vunpack.c.h.b16 %v24
  %v49 = vunpack.c.l.b16 %v25
  %v50 = vunpack.c.h.b16 %v25
  %v51 = vunpack.c.l.b16 %v26
  %v52 = vunpack.c.h.b16 %v26
  %v53 = vunpack.c.l.b16 %v27
  %v54 = vunpack.c.h.b16 %v27
  %v55 = vunpack.c.l.b16 %v28
  %v56 = vunpack.c.h.b16 %v28
  %v57 = vunpack.c.l.b16 %v29
  %v58 = vunpack.c.h.b16 %v29
  %v59 = vunpack.c.l.b16 %v30
  %v60 = vunpack.c.h.b16 %v30
  %v61 = vpack.c.b16 %v49, %v45
  %v62 = vpack.c.b16 %v50, %v46
  %v63 = vpack.c.b16 %v51, %v47
  %v64 = vpack.c.b16 %v52, %v48
  %v65 = vpack.c.b16 %v57, %v53
  %v66 = vpack.c.b16 %v58, %v54
  %v67 = vpack.c.b16 %v59, %v55
  %v68 = vpack.c.b16 %v60, %v56
  %vm77 = vcmask 261120
  %v79 = vsel %vm77, %v22, 0
  %81 = vmatprep.subr.bf16.mxu0 %v62
  %82 = vmatpush1.bf16.msra.mxu0 %v61
  %83 = vmatprep.subr.bf16.mxu0 %v66
  %84 = vmatpush1.bf16.msra.mxu0 %v65
  %85 = vmatprep.subr.bf16.mxu0 0
  %86 = vmatpush1.bf16.msra.mxu0 0
  %87 = vmatprep.subr.bf16.mxu0 0
  %88 = vmatpush1.bf16.msra.mxu0 0
  %89 = vmatprep.subr.bf16.mxu0 0
  %90 = vmatpush1.bf16.msra.mxu0 0
  %91 = vmatprep.subr.bf16.mxu0 0
  %92 = vmatpush1.bf16.msra.mxu0 0
  %93 = vmatprep.subr.bf16.mxu0 0
  %94 = vmatpush1.bf16.msra.mxu0 0
  %95 = vmatprep.subr.bf16.mxu0 0
  %96 = vmatpush1.bf16.msra.mxu0 0
  %97 = vmatprep.subr.bf16.mxu0 0
  %98 = vmatpush1.bf16.msra.mxu0 0
  %99 = vmatprep.subr.bf16.mxu0 0
  %100 = vmatpush1.bf16.msra.mxu0 0
  %101 = vmatprep.subr.bf16.mxu0 0
  %102 = vmatpush1.bf16.msra.mxu0 0
  %103 = vmatprep.subr.bf16.mxu0 0
  %104 = vmatpush1.bf16.msra.mxu0 0
  %105 = vmatprep.subr.bf16.mxu0 0
  %106 = vmatpush1.bf16.msra.mxu0 0
  %107 = vmatprep.subr.bf16.mxu0 0
  %108 = vmatpush1.bf16.msra.mxu0 0
  %109 = vmatprep.subr.bf16.mxu0 0
  %110 = vmatpush1.bf16.msra.mxu0 0
  %111 = vmatprep.subr.bf16.mxu0 0
  %112 = vmatpush1.bf16.msra.mxu0 0
  %113 = vmatprep.mubr.bf16.mxu0 0
  %114 = vmatmul.mubr.bf16.gmra.mrb[0].mxu0 %v79
  %v115 = vpop.f32.mrb[0].mxu0
  %v116 = vadd.f32 %v35, %v115
  %v117 = vpop.f32.mrb[0].mxu0
  %v118 = vadd.f32 %v35, %v117
  %v119 = vpop.f32.mrb[0].mxu0
  %v120 = vpop.f32.mrb[0].mxu0
  %121 = vdwg.mxu0
  %122 = vmatprep.subr.bf16.mxu0 %v64
  %123 = vmatpush1.bf16.msra.mxu0 %v63
  %124 = vmatprep.subr.bf16.mxu0 %v68
  %125 = vmatpush1.bf16.msra.mxu0 %v67
  %126 = vmatprep.subr.bf16.mxu0 0
  %127 = vmatpush1.bf16.msra.mxu0 0
  %128 = vmatprep.subr.bf16.mxu0 0
  %129 = vmatpush1.bf16.msra.mxu0 0
  %130 = vmatprep.subr.bf16.mxu0 0
  %131 = vmatpush1.bf16.msra.mxu0 0
  %132 = vmatprep.subr.bf16.mxu0 0
  %133 = vmatpush1.bf16.msra.mxu0 0
  %134 = vmatprep.subr.bf16.mxu0 0
  %135 = vmatpush1.bf16.msra.mxu0 0
  %136 = vmatprep.subr.bf16.mxu0 0
  %137 = vmatpush1.bf16.msra.mxu0 0
  %138 = vmatprep.subr.bf16.mxu0 0
  %139 = vmatpush1.bf16.msra.mxu0 0
  %140 = vmatprep.subr.bf16.mxu0 0
  %141 = vmatpush1.bf16.msra.mxu0 0
  %142 = vmatprep.subr.bf16.mxu0 0
  %143 = vmatpush1.bf16.msra.mxu0 0
  %144 = vmatprep.subr.bf16.mxu0 0
  %145 = vmatpush1.bf16.msra.mxu0 0
  %146 = vmatprep.subr.bf16.mxu0 0
  %147 = vmatpush1.bf16.msra.mxu0 0
  %148 = vmatprep.subr.bf16.mxu0 0
  %149 = vmatpush1.bf16.msra.mxu0 0
  %150 = vmatprep.subr.bf16.mxu0 0
  %151 = vmatpush1.bf16.msra.mxu0 0
  %152 = vmatprep.subr.bf16.mxu0 0
  %153 = vmatpush1.bf16.msra.mxu0 0
  %154 = vmatprep.mubr.bf16.mxu0 0
  %155 = vmatmul.mubr.bf16.gmra.mrb[0].mxu0 %v79
  %v156 = vpop.f32.mrb[0].mxu0
  %v157 = vadd.f32 %v35, %v156
  %v158 = vpop.f32.mrb[0].mxu0
  %v159 = vadd.f32 %v35, %v158
  %v160 = vpop.f32.mrb[0].mxu0
  %v161 = vpop.f32.mrb[0].mxu0
  %162 = vdwg.mxu0
  %s163 = sld [smem:[#allocation2]]
  %vm164 = vcmp.ge.f32.partialorder %v116, 0.0
  %vm165 = vcmp.ge.f32.partialorder %v118, 0.0
  %vm166 = vcmp.ge.f32.partialorder %v157, 0.0
  %vm167 = vcmp.ge.f32.partialorder %v159, 0.0
  %v168 = vstv %s163
  %v169 = vmul.f32 %v168, %v116
  %v170 = vmul.f32 %v168, %v118
  %v171 = vmul.f32 %v168, %v157
  %v172 = vmul.f32 %v168, %v159
  %v173 = vsel %vm164, %v116, %v169
  %v174 = vsel %vm165, %v118, %v170
  %v175 = vsel %vm166, %v157, %v171
  %v176 = vsel %vm167, %v159, %v172
  %v177 = vld [vmem:[%s4] sm:$0xff]
  %v178 = vld [vmem:[%s4 + $0x8] sm:$0xff]
  %v181 = vcombine.high %v177, %v177
  %v182 = vcombine.high %v178, %v178
  %v185 = vadd.f32 %v173, %v177
  %v186 = vadd.f32 %v174, %v181
  %v187 = vadd.f32 %v175, %v178
  %v188 = vadd.f32 %v176, %v182
  %v193 = vcombine.low %v185, %v186
  %v194 = vcombine.low %v187, %v188
  %197 = vst [vmem:[%s5] sm:$0xff] %v193
  %198 = vst [vmem:[%s5 + $0x8] sm:$0xff] %v194
  // Predicated region
  $region22: #{encoder_mdcblock1_forward.6} parent=0 // pred_check
    _
  $region23: #{encoder_mdcblock1_forward.6} parent=0 // pred_check_branch
    %200 = sbr.rel (0) target = $region25
  $region24: #{encoder_mdcblock1_forward.6} parent=0 // pred_region
    _
  $region25: #{encoder_mdcblock1_forward.6} parent=0 // pred_fallthru
    _
  // Predicated region
  $region26: #{encoder_mdcblock1_forward.6} parent=0 // pred_check
    _
  $region27: #{encoder_mdcblock1_forward.6} parent=0 // pred_check_branch
    %202 = sbr.rel (0) target = $region29
  $region28: #{encoder_mdcblock1_forward.6} parent=0 // pred_region
    _
  $region29: #{encoder_mdcblock1_forward.6} parent=0 // pred_fallthru
    _

// kernel: encoder_mdcblock1_forward.7
$region0: #{encoder_mdcblock1_forward.7}
  #allocation0 [shape = 'u32[]', space=smem, size = 0x4, offset = 0x4, fixed_abs, tag = 'smem constant byte address 0x4 - core index']
  #allocation1 [shape = 'u32[144,128]{1,0:T(1,128)}', space=vmem, size = 0x12000, scoped, tag = 'internal scratch']
  #allocation2 [shape = 'f32[1]{0:T(128)S(6)}', space=smem, size = 0x200, scoped, tag = 'scoped memory for encoder_mdcblock1_forward.7']
  %s0 = inlined_call_operand.vmem [shape: bf16[64,128], index: 0, kind: input, shape index: {}]
  %s1 = inlined_call_operand.vmem [shape: bf16[8,64], index: 1, kind: input, shape index: {}]
  %s2 = inlined_call_operand.vmem [shape: f32[8,1], index: 2, kind: input, shape index: {}]
  %s3 = inlined_call_operand.<no memory space> [shape: f32[1], index: 3, kind: input, shape index: {}]
  %s4 = inlined_call_operand.vmem [shape: f32[8,128], index: 4, kind: input, shape index: {}]
  %s5 = inlined_call_operand.vmem [shape: f32[8,128], index: 5, kind: output, shape index: {}]
  %s6 = sld [smem:[#allocation0]]
  $region30: #{encoder_mdcblock1_forward.7} parent=0
    _
  %s8 = ssub.s32 1, %s6
  %s9 = scalar_select 0, %s8, %s6
  %10 = sst [smem:[#allocation2]] %s3
  // Predicated region
  $region2: #{encoder_mdcblock1_forward.7} parent=0 // pred_check
    _
  $region3: #{encoder_mdcblock1_forward.7} parent=0 // pred_check_branch
    %12 = sbr.rel (0) target = $region5
  $region4: #{encoder_mdcblock1_forward.7} parent=0 // pred_region
    _
  $region5: #{encoder_mdcblock1_forward.7} parent=0 // pred_fallthru
    _
  // Predicated region
  $region6: #{encoder_mdcblock1_forward.7} parent=0 // pred_check
    _
  $region7: #{encoder_mdcblock1_forward.7} parent=0 // pred_check_branch
    %14 = sbr.rel (0) target = $region9
  $region8: #{encoder_mdcblock1_forward.7} parent=0 // pred_region
    _
  $region9: #{encoder_mdcblock1_forward.7} parent=0 // pred_fallthru
    _
  // Predicated region
  $region10: #{encoder_mdcblock1_forward.7} parent=0 // pred_check
    _
  $region11: #{encoder_mdcblock1_forward.7} parent=0 // pred_check_branch
    %16 = sbr.rel (0) target = $region13
  $region12: #{encoder_mdcblock1_forward.7} parent=0 // pred_region
    _
  $region13: #{encoder_mdcblock1_forward.7} parent=0 // pred_fallthru
    _
  // Predicated region
  $region14: #{encoder_mdcblock1_forward.7} parent=0 // pred_check
    _
  $region15: #{encoder_mdcblock1_forward.7} parent=0 // pred_check_branch
    %18 = sbr.rel (0) target = $region17
  $region16: #{encoder_mdcblock1_forward.7} parent=0 // pred_region
    _
  $region17: #{encoder_mdcblock1_forward.7} parent=0 // pred_fallthru
    _
  // Predicated region
  $region18: #{encoder_mdcblock1_forward.7} parent=0 // pred_check
    _
  $region19: #{encoder_mdcblock1_forward.7} parent=0 // pred_check_branch
    %20 = sbr.rel (0) target = $region21
  $region20: #{encoder_mdcblock1_forward.7} parent=0 // pred_region
    _
  $region21: #{encoder_mdcblock1_forward.7} parent=0 // pred_fallthru
    _
  %v22 = vld [vmem:[%s1] sm:$0xf]
  %v23 = vld [vmem:[%s0] sm:$0xf]
  %v24 = vld [vmem:[%s0 + $0x4] sm:$0xf]
  %v25 = vld [vmem:[%s0 + $0x8] sm:$0xf]
  %v26 = vld [vmem:[%s0 + $0xc] sm:$0xf]
  %v27 = vld [vmem:[%s0 + $0x10] sm:$0xf]
  %v28 = vld [vmem:[%s0 + $0x14] sm:$0xf]
  %v29 = vld [vmem:[%s0 + $0x18] sm:$0xf]
  %v30 = vld [vmem:[%s0 + $0x1c] sm:$0xf]
  %v31 = vld [vmem:[%s2] sm:$0xff]
  %33 = vset.pattern.permute.xlu0 0
  %34 = vperm.xlu0 %33, %v31
  %v35 = vpop.permute.xlu0 %34
  %v45 = vunpack.c.l.b16 %v23
  %v46 = vunpack.c.l.b16 %v24
  %v47 = vunpack.c.l.b16 %v25
  %v48 = vunpack.c.l.b16 %v26
  %v49 = vunpack.c.l.b16 %v27
  %v50 = vunpack.c.l.b16 %v28
  %v51 = vunpack.c.l.b16 %v29
  %v52 = vunpack.c.l.b16 %v30
  %v53 = vpack.c.b16 %v46, %v45
  %v54 = vpack.c.b16 %v48, %v47
  %v55 = vpack.c.b16 %v50, %v49
  %v56 = vpack.c.b16 %v52, %v51
  %vm61 = vcmask 523264
  %v63 = vsel %vm61, %v22, 0
  %65 = vmatprep.subr.bf16.mxu0 0
  %66 = vmatpush1.bf16.msra.mxu0 %v53
  %67 = vmatprep.subr.bf16.mxu0 0
  %68 = vmatpush1.bf16.msra.mxu0 %v54
  %69 = vmatprep.subr.bf16.mxu0 0
  %70 = vmatpush1.bf16.msra.mxu0 %v55
  %71 = vmatprep.subr.bf16.mxu0 0
  %72 = vmatpush1.bf16.msra.mxu0 %v56
  %73 = vmatprep.subr.bf16.mxu0 0
  %74 = vmatpush1.bf16.msra.mxu0 0
  %75 = vmatprep.subr.bf16.mxu0 0
  %76 = vmatpush1.bf16.msra.mxu0 0
  %77 = vmatprep.subr.bf16.mxu0 0
  %78 = vmatpush1.bf16.msra.mxu0 0
  %79 = vmatprep.subr.bf16.mxu0 0
  %80 = vmatpush1.bf16.msra.mxu0 0
  %81 = vmatprep.subr.bf16.mxu0 0
  %82 = vmatpush1.bf16.msra.mxu0 0
  %83 = vmatprep.subr.bf16.mxu0 0
  %84 = vmatpush1.bf16.msra.mxu0 0
  %85 = vmatprep.subr.bf16.mxu0 0
  %86 = vmatpush1.bf16.msra.mxu0 0
  %87 = vmatprep.subr.bf16.mxu0 0
  %88 = vmatpush1.bf16.msra.mxu0 0
  %89 = vmatprep.subr.bf16.mxu0 0
  %90 = vmatpush1.bf16.msra.mxu0 0
  %91 = vmatprep.subr.bf16.mxu0 0
  %92 = vmatpush1.bf16.msra.mxu0 0
  %93 = vmatprep.subr.bf16.mxu0 0
  %94 = vmatpush1.bf16.msra.mxu0 0
  %95 = vmatprep.subr.bf16.mxu0 0
  %96 = vmatpush1.bf16.msra.mxu0 0
  %97 = vmatprep.mubr.bf16.mxu0 0
  %98 = vmatmul.mubr.bf16.gmra.mrb[0].mxu0 %v63
  %v99 = vpop.f32.mrb[0].mxu0
  %v100 = vadd.f32 %v35, %v99
  %v101 = vpop.f32.mrb[0].mxu0
  %v102 = vpop.f32.mrb[0].mxu0
  %v103 = vpop.f32.mrb[0].mxu0
  %104 = vdwg.mxu0
  %s105 = sld [smem:[#allocation2]]
  %vm106 = vcmp.ge.f32.partialorder %v100, 0.0
  %v107 = vstv %s105
  %v108 = vmul.f32 %v107, %v100
  %v109 = vsel %vm106, %v100, %v108
  %v110 = vld [vmem:[%s4] sm:$0xff]
  %v111 = vadd.f32 %v109, %v110
  %112 = vst [vmem:[%s5] sm:$0xff] %v111
  // Predicated region
  $region22: #{encoder_mdcblock1_forward.7} parent=0 // pred_check
    _
  $region23: #{encoder_mdcblock1_forward.7} parent=0 // pred_check_branch
    %114 = sbr.rel (0) target = $region25
  $region24: #{encoder_mdcblock1_forward.7} parent=0 // pred_region
    _
  $region25: #{encoder_mdcblock1_forward.7} parent=0 // pred_fallthru
    _
  // Predicated region
  $region26: #{encoder_mdcblock1_forward.7} parent=0 // pred_check
    _
  $region27: #{encoder_mdcblock1_forward.7} parent=0 // pred_check_branch
    %116 = sbr.rel (0) target = $region29
  $region28: #{encoder_mdcblock1_forward.7} parent=0 // pred_region
    _
  $region29: #{encoder_mdcblock1_forward.7} parent=0 // pred_fallthru
    _

</llo_original>
